<compile_context>
chip_gen: v7x
topology: tpu7x:2x2x1
jax: 0.10.0
libtpu: 0.0.40
codegen_flags: <defaults>
</compile_context>

<pallas_src>
import functools

import jax
import jax.numpy as jnp
from jax.experimental import pallas as pl
from jax.experimental.pallas import tpu as pltpu


# ----------------------------------------------------------------------------
# Small helpers
# ----------------------------------------------------------------------------
def _round_up(x, m):
    return ((x + m - 1) // m) * m


def _vmem_limit_bytes():
    """Per-chip VMEM limit: ~3/4 of physical capacity, capped so a setting
    tuned on v5e/v6e (128 MiB) can never OOM a v7x core (64 MiB)."""
    try:
        cap = int(pltpu.get_tpu_info().vmem_capacity_bytes)
    except Exception:  # interpret mode / older runtime: assume smallest chip
        cap = 64 * 1024 * 1024
    return max(32 * 1024 * 1024, min((cap * 3) // 4, 112 * 1024 * 1024))


def _pick_block_b(B, cap=128):
    """Largest sublane-aligned divisor of B that yields >=2 batch blocks
    (so both v7x TensorCores get work); fall back to the full batch."""
    if B <= 8:
        return B
    bb = (min(B // 2, cap) // 8) * 8
    while bb >= 8:
        if B % bb == 0:
            return bb
        bb -= 8
    return B


# ----------------------------------------------------------------------------
# Kernel 1: clip_project MLP  (x @ W1 + b1) -> tanh -> (h @ W2 + b2)
# ----------------------------------------------------------------------------
def _mlp_kernel(x_ref, w1_ref, b1_ref, w2_ref, b2_ref, out_ref, h_ref,
                *, mxu_bf16):
    # Hidden activation computed once per batch tile (j == 0), reused for
    # every streamed d_out tile of W2.
    @pl.when(pl.program_id(1) == 0)
    def _hidden():
        x = x_ref[...]
        w1 = w1_ref[...]
        if mxu_bf16:  # bf16 MXU operands (v6e/v7x); loosen tolerances if used
            x = x.astype(jnp.bfloat16)
            w1 = w1.astype(jnp.bfloat16)
        h_ref[...] = jnp.tanh(
            jnp.dot(x, w1, preferred_element_type=jnp.float32) + b1_ref[...]
        )

    h = h_ref[...]
    w2 = w2_ref[...]
    if mxu_bf16:
        h = h.astype(jnp.bfloat16)
        w2 = w2.astype(jnp.bfloat16)
    out_ref[...] = (
        jnp.dot(h, w2, preferred_element_type=jnp.float32) + b2_ref[...]
    ).astype(out_ref.dtype)


def clip_project(x, w1, b1, w2, b2, *, block_b=None, block_n=None,
                 mxu_bf16=False):
    """MLP with a batch grid and a streamed d_out grid; x/W1/b1 stay resident
    in VMEM, W2/b2 tiles are double-buffered over the d_out axis."""
    B, d_in = x.shape
    d_hid = w1.shape[1]
    d_out = w2.shape[1]
    if block_b is None:
        block_b = _pick_block_b(B)
    assert B % block_b == 0 and (block_b % 8 == 0 or block_b == B)
    if block_n is None:
        block_n = d_out if d_out <= 512 else 512  # lane multiple of 128

    kernel = functools.partial(_mlp_kernel, mxu_bf16=mxu_bf16)
    return pl.pallas_call(
        kernel,
        out_shape=jax.ShapeDtypeStruct((B, d_out), jnp.float32),
        grid_spec=pltpu.PrefetchScalarGridSpec(
            num_scalar_prefetch=0,
            grid=(B // block_b, pl.cdiv(d_out, block_n)),
            in_specs=[
                pl.BlockSpec((block_b, d_in), lambda i, j: (i, 0)),
                pl.BlockSpec((d_in, d_hid), lambda i, j: (0, 0)),     # resident
                pl.BlockSpec((1, d_hid), lambda i, j: (0, 0)),        # resident
                pl.BlockSpec((d_hid, block_n), lambda i, j: (0, j)),  # streamed
                pl.BlockSpec((1, block_n), lambda i, j: (0, j)),      # streamed
            ],
            out_specs=pl.BlockSpec((block_b, block_n), lambda i, j: (i, j)),
            scratch_shapes=[pltpu.VMEM((block_b, d_hid), jnp.float32)],
        ),
        compiler_params=pltpu.CompilerParams(
            # d_out axis must be sequential: the hidden scratch is computed at
            # j == 0 and reused for j > 0 within a batch tile.
            dimension_semantics=("parallel", "arbitrary"),
            vmem_limit_bytes=_vmem_limit_bytes(),
        ),
    )(x, w1, b1, w2, b2)


# ----------------------------------------------------------------------------
# Kernel 2: sequence log-prob scoring, online-softmax over vocab tiles.
#   Grid = (batch tiles [parallel], vocab tiles [arbitrary]).
#   Per vocab tile (single fused pass, bf16 logits upcast in-tile):
#     mask ragged trailing tile, running max m, running exp-sum s,
#     running gathered (scaled) logit g.
#   Finalize (last vocab tile):
#     logp_sel = g - (m + log s)
#     extra    = (inclusive-cumsum of (idx == eos)) > 0     (via MXU matmul)
#     score    = sum(logp_sel * (1 - extra)) / max(T - sum(extra), 1)
# ----------------------------------------------------------------------------
def _score_kernel(logits_ref, idx_ref, out_ref, m_sc, s_sc, g_sc,
                  *, eos_id, inv_temp, vocab_size):
    v = pl.program_id(1)
    n_v = pl.num_programs(1)
    bB, T, bV = logits_ref.shape

    @pl.when(v == 0)
    def _init():
        m_sc[...] = jnp.full_like(m_sc, -jnp.inf)
        s_sc[...] = jnp.zeros_like(s_sc)
        g_sc[...] = jnp.zeros_like(g_sc)

    idx = idx_ref[...]                                       # (bB, T) int32
    z = logits_ref[...].astype(jnp.float32) * inv_temp       # (bB, T, bV)

    # Lane-only iota (1,1,bV): cheaper than a full-tile iota; reused for the
    # ragged-tile mask and the token gather.
    lane = jax.lax.broadcasted_iota(jnp.int32, (1, 1, bV), 2)

    # Ragged trailing vocab tile (no wrapper-side pad): drop OOB garbage lanes
    # BEFORE they can reach the max / exp-sum accumulators.  Static no-op when
    # the vocab is an exact multiple of the tile width.
    if vocab_size % bV != 0:
        z = jnp.where(lane < (vocab_size - v * bV), z, -jnp.inf)

    m_prev = m_sc[...]
    m_new = jnp.maximum(m_prev, jnp.max(z, axis=-1))         # (bB, T)
    corr = jnp.exp(m_prev - m_new)
    s_sc[...] = s_sc[...] * corr + jnp.sum(jnp.exp(z - m_new[..., None]), axis=-1)
    m_sc[...] = m_new

    # Gather the (temperature-scaled) logit of each generated token; exactly
    # one vocab tile contributes per (b, t).  Shift the index, not the iota
    # (one int32 sub on (bB,T) instead of a full-tile int32 add).
    local_idx = idx - v * bV                                 # (bB, T)
    g_sc[...] += jnp.sum(jnp.where(lane == local_idx[:, :, None], z, 0.0),
                         axis=-1)

    @pl.when(v == n_v - 1)
    def _finalize():
        lse = m_sc[...] + jnp.log(s_sc[...])                 # (bB, T)
        logp_sel = g_sc[...] - lse                           # (bB, T)

        # EOS handling on the MXU (idle otherwise): inclusive cumsum of the
        # EOS indicator via is_eos @ tri, tri[s, t] = (s <= t).
        is_eos = (idx == eos_id).astype(jnp.float32)         # (bB, T)
        row = jax.lax.broadcasted_iota(jnp.int32, (T, T), 0)
        col = jax.lax.broadcasted_iota(jnp.int32, (T, T), 1)
        tri = (row <= col).astype(jnp.float32)
        cum = jnp.dot(is_eos, tri, preferred_element_type=jnp.float32)
        extra = (cum > 0.0).astype(jnp.float32)              # (bB, T)
        masked_lp = logp_sel * (1.0 - extra)

        num = jnp.sum(masked_lp, axis=-1, keepdims=True)     # (bB, 1)
        n_extra = jnp.sum(extra, axis=-1, keepdims=True)     # (bB, 1)

        msg_len = jnp.maximum(jnp.float32(T) - n_extra, 1.0)  # guard 0-length
        inv_len = pl.reciprocal(msg_len, approx=True)          # EUP
        inv_len = inv_len * (2.0 - msg_len * inv_len)           # Newton refine
        out_ref[...] = (num * inv_len).astype(out_ref.dtype)


def score_captions(logits, indices, *, eos_id, temp, block_b=None,
                   block_v=1024):
    """Per-sequence masked mean log-prob.  Reads the (B,T,V) logits (bf16 or
    f32) from HBM exactly once, no padding pass, vocab tile auto-sized to the
    per-chip VMEM budget."""
    B, T, V = logits.shape
    if block_b is None:
        block_b = _pick_block_b(B)
    assert B % block_b == 0 and (block_b % 8 == 0 or block_b == B)

    vmem_limit = _vmem_limit_bytes()
    itemsize = jnp.dtype(logits.dtype).itemsize

    # Vocab tile: lane multiple of 128, no larger than the (rounded-up) vocab,
    # shrunk until the double-buffered working set fits the per-chip budget.
    bv = min(max(block_v, 128), _round_up(V, 128))
    bv = max(128, (bv // 128) * 128)
    budget = int(vmem_limit * 0.8)
    while bv > 128:
        live = (2 * block_b * T * bv * itemsize    # logits tiles (double-buf)
                + 2 * block_b * T * 4              # idx tiles (double-buf)
                + 3 * block_b * T * 4              # m / s / g scratch
                + 2 * block_b * 4)                 # output
        if live <= budget:
            break
        bv -= 128

    kernel = functools.partial(_score_kernel, eos_id=eos_id,
                               inv_temp=float(1.0 / temp), vocab_size=V)
    out = pl.pallas_call(
        kernel,
        out_shape=jax.ShapeDtypeStruct((B, 1), jnp.float32),
        grid_spec=pltpu.PrefetchScalarGridSpec(
            num_scalar_prefetch=0,
            grid=(B // block_b, pl.cdiv(V, bv)),
            in_specs=[
                pl.BlockSpec((block_b, T, bv), lambda b, v: (b, 0, v)),
                pl.BlockSpec((block_b, T), lambda b, v: (b, 0)),
            ],
            out_specs=pl.BlockSpec((block_b, 1), lambda b, v: (b, 0)),
            scratch_shapes=[pltpu.VMEM((block_b, T), jnp.float32)] * 3,
        ),
        compiler_params=pltpu.CompilerParams(
            # batch axis parallel (2 TCs on v7x), vocab axis is the reduction.
            dimension_semantics=("parallel", "arbitrary"),
            vmem_limit_bytes=vmem_limit,
        ),
    )(logits, indices.astype(jnp.int32))
    return out[:, 0]


# ----------------------------------------------------------------------------
# Pure-JAX references for correctness checking
# ----------------------------------------------------------------------------
def _ref_mlp(x, w1, b1, w2, b2):
    return jnp.tanh(x @ w1 + b1) @ w2 + b2


def _ref_score(logits, indices, eos_id, temp):
    lp = jax.nn.log_softmax(logits / temp, axis=-1)
    g = jnp.take_along_axis(lp, indices[..., None], axis=-1)[..., 0]
    extra = jnp.cumsum((indices == eos_id).astype(jnp.int32), axis=1) > 0
    mask = (~extra).astype(jnp.float32)
    # torch would give 0/0 = NaN if the first token is EOS; both kernel and
    # reference clamp the length to 1 instead.
    msg_len = jnp.maximum(indices.shape[1] - extra.sum(axis=1), 1)
    return (g * mask).sum(axis=1) / msg_len


# ----------------------------------------------------------------------------
# Driver
# ----------------------------------------------------------------------------
if __name__ == "__main__":
    # Small synthetic configuration (GPT-2 sizes scaled down).
    B = 8                       # batch (sublane-aligned)
    clip_prefix_size = 16       # input_dim of the MLP
    gpt_embedding_size = 32     # synthetic "wte" embedding width
    nb_prefix_tokens = 4
    hidden_dim = gpt_embedding_size * nb_prefix_tokens // 2     # 64
    output_dim = gpt_embedding_size * nb_prefix_tokens          # 128
    vocab_size = 2000           # NOT a multiple of 128: exercises ragged tile
    eos_token_id = vocab_size - 1
    T = 8                       # number of generated tokens (max_k)
    temp = 0.3                  # training / non-greedy branch of forward()

    key = jax.random.PRNGKey(0)
    k_x, k_w1, k_b1, k_w2, k_b2, k_idx, k_logits, k_base = jax.random.split(key, 8)

    # Deterministic parameter init (synthetic, not a checkpoint load).
    image_feats = jax.random.normal(k_x, (B, clip_prefix_size), jnp.float32)
    w1 = jax.random.normal(k_w1, (clip_prefix_size, hidden_dim), jnp.float32) * 0.1
    b1 = jax.random.normal(k_b1, (1, hidden_dim), jnp.float32) * 0.01
    w2 = jax.random.normal(k_w2, (hidden_dim, output_dim), jnp.float32) * 0.1
    b2 = jax.random.normal(k_b2, (1, output_dim), jnp.float32) * 0.01

    # --- hot path 1: clip_project MLP (Pallas) ---
    # (set mxu_bf16=True on v6e/v7x at production sizes; needs looser atol)
    prompts_flat = clip_project(image_feats, w1, b1, w2, b2)
    prompts = prompts_flat.reshape(B, nb_prefix_tokens, -1)     # glue reshape

    # TODO(synk): GPT-2 generate / beam search / tokenizer decode, the
    # StopTokenLogitsProcessor, the in-place embedding-table write and the
    # CLIP visual encoder have no Pallas equivalent; the generated indices and
    # GPT logits below are deterministic synthetic stand-ins.
    indices = jax.random.randint(k_idx, (B, T), 0, vocab_size - 1, jnp.int32)
    indices = indices.at[0, 5].set(eos_token_id)                # exercise EOS mask
    indices = indices.at[3, 2].set(eos_token_id)
    # bf16 logits end-to-end: halves HBM traffic of the dominant tensor.
    logits = jax.random.normal(k_logits, (B, T, vocab_size),
                               jnp.float32).astype(jnp.bfloat16)

    # --- hot path 2: caption log-prob scoring (Pallas) ---
    log_probs = score_captions(logits, indices, eos_id=eos_token_id, temp=temp)

    # torch.randn(1) placeholder third output
    baseline = jax.random.normal(k_base, (1,), jnp.float32)

    jax.block_until_ready((prompts, log_probs, baseline))

    # Correctness check against pure-JAX references (same bf16-rounded logits).
    ref_prompts = _ref_mlp(image_feats, w1, b1, w2, b2).reshape(B, nb_prefix_tokens, -1)
    ref_lp = _ref_score(logits.astype(jnp.float32), indices, eos_token_id, temp)
    assert jnp.allclose(prompts, ref_prompts, atol=1e-4, rtol=1e-4)
    assert jnp.allclose(log_probs, ref_lp, atol=1e-3, rtol=1e-3)

    print("KERNEL_OK")
</pallas_src>

<mosaic_0001>
module attributes {stable_mosaic.version = 11 : i64} {
  func.func @_mlp_kernel(%arg0: i32, %arg1: i32, %arg2: memref<8x16xf32, #tpu.memory_space<vmem>>, %arg3: memref<16x64xf32, #tpu.memory_space<vmem>>, %arg4: memref<1x64xf32, #tpu.memory_space<vmem>>, %arg5: memref<64x128xf32, #tpu.memory_space<vmem>>, %arg6: memref<1x128xf32, #tpu.memory_space<vmem>>, %arg7: memref<8x128xf32, #tpu.memory_space<vmem>>, %arg8: memref<8x64xf32, #tpu.memory_space<vmem>>) attributes {dimension_semantics = [#tpu.dimension_semantics<parallel>, #tpu.dimension_semantics<arbitrary>], iteration_bounds = array<i64: 1, 1>, scalar_prefetch = 0 : i64, scratch_operands = 1 : i64, tpu.core_type = #tpu.core_type<tc>, window_params = [{transform_indices = @transform_0, window_bounds = array<i64: 8, 16>}, {pipeline_mode = #tpu.pipeline_mode<synchronous>, transform_indices = @transform_1, window_bounds = array<i64: 16, 64>}, {pipeline_mode = #tpu.pipeline_mode<synchronous>, transform_indices = @transform_2, window_bounds = array<i64: 1, 64>}, {transform_indices = @transform_3, window_bounds = array<i64: 64, 128>}, {transform_indices = @transform_4, window_bounds = array<i64: 1, 128>}, {transform_indices = @transform_5, window_bounds = array<i64: 8, 128>}]} {
    %c0_i32 = arith.constant 0 : i32
    %0 = arith.cmpi eq, %arg1, %c0_i32 : i32
    %1 = arith.extui %0 : i1 to i32
    %c0_i32_0 = arith.constant 0 : i32
    %2 = arith.cmpi ne, %1, %c0_i32_0 : i32
    scf.if %2 {
      %c0_8 = arith.constant 0 : index
      %c0_9 = arith.constant 0 : index
      %10 = vector.load %arg2[%c0_8, %c0_9] : memref<8x16xf32, #tpu.memory_space<vmem>>, vector<8x16xf32>
      %c0_10 = arith.constant 0 : index
      %c0_11 = arith.constant 0 : index
      %11 = vector.load %arg3[%c0_10, %c0_11] : memref<16x64xf32, #tpu.memory_space<vmem>>, vector<16x64xf32>
      %cst_12 = arith.constant dense<0.000000e+00> : vector<8x64xf32>
      %12 = tpu.matmul %10, %11, %cst_12 {dimension_numbers = #tpu.dot_dimension_numbers<[1], [0], [0], [1], [0, 0, 1, 1], [], []>} : vector<8x16xf32>, vector<16x64xf32>, vector<8x64xf32> -> vector<8x64xf32>
      %c0_13 = arith.constant 0 : index
      %c0_14 = arith.constant 0 : index
      %13 = vector.load %arg4[%c0_13, %c0_14] : memref<1x64xf32, #tpu.memory_space<vmem>>, vector<1x64xf32>
      %14 = vector.broadcast %13 : vector<1x64xf32> to vector<8x64xf32>
      %15 = arith.addf %12, %14 : vector<8x64xf32>
      %16 = math.tanh %15 : vector<8x64xf32>
      %c0_15 = arith.constant 0 : index
      %c0_16 = arith.constant 0 : index
      %17 = vector.load %arg8[%c0_15, %c0_16] : memref<8x64xf32, #tpu.memory_space<vmem>>, vector<8x64xf32>
      tpu.vector_store %arg8[%c0_15, %c0_16], %16 {strides = array<i32>} : memref<8x64xf32, #tpu.memory_space<vmem>>, vector<8x64xf32>,
    } else {
    }
    %c0 = arith.constant 0 : index
    %c0_1 = arith.constant 0 : index
    %3 = vector.load %arg8[%c0, %c0_1] : memref<8x64xf32, #tpu.memory_space<vmem>>, vector<8x64xf32>
    %c0_2 = arith.constant 0 : index
    %c0_3 = arith.constant 0 : index
    %4 = vector.load %arg5[%c0_2, %c0_3] : memref<64x128xf32, #tpu.memory_space<vmem>>, vector<64x128xf32>
    %cst = arith.constant dense<0.000000e+00> : vector<8x128xf32>
    %5 = tpu.matmul %3, %4, %cst {dimension_numbers = #tpu.dot_dimension_numbers<[1], [0], [0], [1], [0, 0, 1, 1], [], []>} : vector<8x64xf32>, vector<64x128xf32>, vector<8x128xf32> -> vector<8x128xf32>
    %c0_4 = arith.constant 0 : index
    %c0_5 = arith.constant 0 : index
    %6 = vector.load %arg6[%c0_4, %c0_5] : memref<1x128xf32, #tpu.memory_space<vmem>>, vector<1x128xf32>
    %7 = vector.broadcast %6 : vector<1x128xf32> to vector<8x128xf32>
    %8 = arith.addf %5, %7 : vector<8x128xf32>
    %c0_6 = arith.constant 0 : index
    %c0_7 = arith.constant 0 : index
    %9 = vector.load %arg7[%c0_6, %c0_7] : memref<8x128xf32, #tpu.memory_space<vmem>>, vector<8x128xf32>
    tpu.vector_store %arg7[%c0_6, %c0_7], %8 {strides = array<i32>} : memref<8x128xf32, #tpu.memory_space<vmem>>, vector<8x128xf32>,
    return
  }
  func.func @transform_0(%arg0: i32, %arg1: i32) -> (i32, i32) {
    %c0_i32 = arith.constant 0 : i32
    %c0_i32_0 = arith.constant 0 : i32
    return %arg0, %c0_i32 : i32, i32
  }
  func.func @transform_1(%arg0: i32, %arg1: i32) -> (i32, i32) {
    %c0_i32 = arith.constant 0 : i32
    %c0_i32_0 = arith.constant 0 : i32
    %c0_i32_1 = arith.constant 0 : i32
    return %c0_i32, %c0_i32_0 : i32, i32
  }
  func.func @transform_2(%arg0: i32, %arg1: i32) -> (i32, i32) {
    %c0_i32 = arith.constant 0 : i32
    %c0_i32_0 = arith.constant 0 : i32
    %c0_i32_1 = arith.constant 0 : i32
    return %c0_i32, %c0_i32_0 : i32, i32
  }
  func.func @transform_3(%arg0: i32, %arg1: i32) -> (i32, i32) {
    %c0_i32 = arith.constant 0 : i32
    %c0_i32_0 = arith.constant 0 : i32
    return %c0_i32, %arg1 : i32, i32
  }
  func.func @transform_4(%arg0: i32, %arg1: i32) -> (i32, i32) {
    %c0_i32 = arith.constant 0 : i32
    %c0_i32_0 = arith.constant 0 : i32
    return %c0_i32, %arg1 : i32, i32
  }
  func.func @transform_5(%arg0: i32, %arg1: i32) -> (i32, i32) {
    %c0_i32 = arith.constant 0 : i32
    return %arg0, %arg1 : i32, i32
  }
}

</mosaic_0001>

<llo_original>
// kernel: tpu_custom_call.1
$region0: #{tpu_custom_call.1}
  #allocation0 [shape = 'u32[]', space=smem, size = 0x4, offset = 0x4, fixed_abs, tag = 'smem constant byte address 0x4 - core index']
  #allocation1 [shape = 'u32[144,128]{1,0:T(1,128)}', space=vmem, size = 0x12000, scoped, tag = 'internal scratch']
  #allocation2 [shape = 'f32[8,64]{1,0:T(8,128)}', space=vmem, size = 0x1000, scoped, tag = 'scratch operand']
  %s0 = inlined_call_operand.hbm [shape: f32[8,16], index: 0, kind: input, shape index: {}]
  %s1 = inlined_call_operand.hbm [shape: f32[16,64], index: 1, kind: input, shape index: {}]
  %s2 = inlined_call_operand.vmem [shape: f32[1,64], index: 2, kind: input, shape index: {}]
  %s3 = inlined_call_operand.hbm [shape: f32[64,128], index: 3, kind: input, shape index: {}]
  %s4 = inlined_call_operand.vmem [shape: f32[1,128], index: 4, kind: input, shape index: {}]
  %s5 = inlined_call_operand.hbm [shape: f32[8,128], index: 5, kind: output, shape index: {}]
  %s6 = sld [smem:[#allocation0]]
  $region46: #{tpu_custom_call.1} parent=0
    _
  %s8 = ssub.s32 1, %s6
  %s9 = scalar_select 0, %s8, %s6
  $region1: #{tpu_custom_call.1} parent=0
    #allocation3 [shape = 'u8[4096]{0}', space=vmem, size = 0x1000, scoped, tag = 'input window, operand 0, single buffered']
    #allocation4 [shape = 's32[1]{0}', space=sflag, size = 0x4, scoped, tag = 'scoped memory for tpu_custom_call.1']
    #allocation5 [shape = 's32[1]{0}', space=sflag, size = 0x4, scoped, tag = 'scoped memory for tpu_custom_call.1']
    #allocation6 [shape = 'u8[8192]{0}', space=vmem, size = 0x2000, scoped, tag = 'input window, operand 1, single buffered']
    #allocation7 [shape = 's32[1]{0}', space=sflag, size = 0x4, scoped, tag = 'scoped memory for tpu_custom_call.1']
    #allocation8 [shape = 'u8[32768]{0}', space=vmem, size = 0x8000, scoped, tag = 'input window, operand 3, single buffered']
    #allocation9 [shape = 'u8[4096]{0}', space=vmem, size = 0x1000, scoped, tag = 'output window, operand 0, single buffered']
    %10 = vsyncpa [#allocation4], 0
    %11 = vsyncpa [#allocation7], 0
    %12 = vsyncpa [#allocation5], 0
    // Predicated region
    $region2: #{tpu_custom_call.1} parent=1 // pred_check
      _
    $region3: #{tpu_custom_call.1} parent=1 // pred_check_branch
      %14 = sbr.rel (0) target = $region5
    $region4: #{tpu_custom_call.1} parent=1 // pred_region
      %s16 = ssub.s32 128, 128
      %17 = vsyncadd [#allocation4], %s16
      %s19 = sshll.u32 [#allocation3], 4
      %s20 = int_to_ptr.vmem [resolvable:$true] %s19
      %22 = dma.hbm_to_vmem [thread:$0]  %s0, 128, %s20, [#allocation4]
    $region5: #{tpu_custom_call.1} parent=1 // pred_fallthru
      _
    // Predicated region
    $region6: #{tpu_custom_call.1} parent=1 // pred_check
      _
    $region7: #{tpu_custom_call.1} parent=1 // pred_check_branch
      %24 = sbr.rel (0) target = $region9
    $region8: #{tpu_custom_call.1} parent=1 // pred_region
      %s26 = ssub.s32 256, 256
      %27 = vsyncadd [#allocation7], %s26
      %s28 = sshll.u32 [#allocation6], 4
      %s29 = int_to_ptr.vmem [resolvable:$true] %s28
      %34 = dma.hbm_to_vmem [thread:$0]  %s1, 256, %s29, [#allocation7], 128, 128, 8
    $region9: #{tpu_custom_call.1} parent=1 // pred_fallthru
      _
    // Predicated region
    $region10: #{tpu_custom_call.1} parent=1 // pred_check
      _
    $region11: #{tpu_custom_call.1} parent=1 // pred_check_branch
      %36 = sbr.rel (0) target = $region13
    $region12: #{tpu_custom_call.1} parent=1 // pred_region
      _
    $region13: #{tpu_custom_call.1} parent=1 // pred_fallthru
      _
    // Predicated region
    $region14: #{tpu_custom_call.1} parent=1 // pred_check
      _
    $region15: #{tpu_custom_call.1} parent=1 // pred_check_branch
      %38 = sbr.rel (0) target = $region17
    $region16: #{tpu_custom_call.1} parent=1 // pred_region
      %s40 = ssub.s32 1024, 1024
      %41 = vsyncadd [#allocation7], %s40
      %s42 = sshll.u32 [#allocation8], 4
      %s43 = int_to_ptr.vmem [resolvable:$true] %s42
      %48 = dma.hbm_to_vmem [thread:$0]  %s3, 1024, %s43, [#allocation7], 128, 128, 8
    $region17: #{tpu_custom_call.1} parent=1 // pred_fallthru
      _
    // Predicated region
    $region18: #{tpu_custom_call.1} parent=1 // pred_check
      _
    $region19: #{tpu_custom_call.1} parent=1 // pred_check_branch
      %50 = sbr.rel (0) target = $region21
    $region20: #{tpu_custom_call.1} parent=1 // pred_region
      _
    $region21: #{tpu_custom_call.1} parent=1 // pred_fallthru
      _
    // Predicated region
    $region22: #{tpu_custom_call.1} parent=1 // pred_check
      _
    $region23: #{tpu_custom_call.1} parent=1 // pred_check_branch
      %52 = sbr.rel (0) target = $region25
    $region24: #{tpu_custom_call.1} parent=1 // pred_region
      %53 = dma.done [#allocation4], 128
    $region25: #{tpu_custom_call.1} parent=1 // pred_fallthru
      _
    // Predicated region
    $region26: #{tpu_custom_call.1} parent=1 // pred_check
      _
    $region27: #{tpu_custom_call.1} parent=1 // pred_check_branch
      %55 = sbr.rel (0) target = $region29
    $region28: #{tpu_custom_call.1} parent=1 // pred_region
      %56 = dma.done [#allocation7], 256
    $region29: #{tpu_custom_call.1} parent=1 // pred_fallthru
      _
    // Predicated region
    $region30: #{tpu_custom_call.1} parent=1 // pred_check
      _
    $region31: #{tpu_custom_call.1} parent=1 // pred_check_branch
      %58 = sbr.rel (0) target = $region33
    $region32: #{tpu_custom_call.1} parent=1 // pred_region
      %59 = dma.done [#allocation7], 1024
    $region33: #{tpu_custom_call.1} parent=1 // pred_fallthru
      _
    %p60 = scmp.eq.s32.totalorder 0, 0
    // Predicated region
    $region34: #{tpu_custom_call.1} parent=1 // pred_check
      %p61 = pneg %p60
    $region35: #{tpu_custom_call.1} parent=1 // pred_check_branch
      %63 = sbr.rel (%p61) target = $region37
    $region36: #{tpu_custom_call.1} parent=1 // pred_region
      %v64 = vld [vmem:[#allocation3] sm:$0xff]
      %v65 = vld [vmem:[#allocation6] sm:$0xff]
      %v66 = vld [vmem:[#allocation6 + $0x8] sm:$0xff]
      %v67 = vld [vmem:[%s2] sm:$0x1]
      %v69 = vlaneseq
      %v70 = vshrl.u32 %v69, 7
      %v71 = vsub.s32 0, %v70
      %v72 = vrot.slane %v67, %v71
      %vm74 = vcmask 130048
      %v76 = vsel %vm74, %v64, 0
      %78 = vmatprep.subr.mxu0 0.0
      %79 = vmatpush1.msra.mxu0 %v65
      %80 = vmatprep.subr.mxu0 0.0
      %81 = vmatpush1.msra.mxu0 %v66
      %82 = vmatprep.subr.mxu0 0.0
      %83 = vmatpush1.msra.mxu0 0.0
      %84 = vmatprep.subr.mxu0 0.0
      %85 = vmatpush1.msra.mxu0 0.0
      %86 = vmatprep.subr.mxu0 0.0
      %87 = vmatpush1.msra.mxu0 0.0
      %88 = vmatprep.subr.mxu0 0.0
      %89 = vmatpush1.msra.mxu0 0.0
      %90 = vmatprep.subr.mxu0 0.0
      %91 = vmatpush1.msra.mxu0 0.0
      %92 = vmatprep.subr.mxu0 0.0
      %93 = vmatpush1.msra.mxu0 0.0
      %94 = vmatprep.subr.mxu0 0.0
      %95 = vmatpush1.msra.mxu0 0.0
      %96 = vmatprep.subr.mxu0 0.0
      %97 = vmatpush1.msra.mxu0 0.0
      %98 = vmatprep.subr.mxu0 0.0
      %99 = vmatpush1.msra.mxu0 0.0
      %100 = vmatprep.subr.mxu0 0.0
      %101 = vmatpush1.msra.mxu0 0.0
      %102 = vmatprep.subr.mxu0 0.0
      %103 = vmatpush1.msra.mxu0 0.0
      %104 = vmatprep.subr.mxu0 0.0
      %105 = vmatpush1.msra.mxu0 0.0
      %106 = vmatprep.subr.mxu0 0.0
      %107 = vmatpush1.msra.mxu0 0.0
      %108 = vmatprep.subr.mxu0 0.0
      %109 = vmatpush1.msra.mxu0 0.0
      %110 = vmatprep.subr.mxu0 0.0
      %111 = vmatpush1.msra.mxu0 0.0
      %112 = vmatprep.subr.mxu0 0.0
      %113 = vmatpush1.msra.mxu0 0.0
      %114 = vmatprep.subr.mxu0 0.0
      %115 = vmatpush1.msra.mxu0 0.0
      %116 = vmatprep.subr.mxu0 0.0
      %117 = vmatpush1.msra.mxu0 0.0
      %118 = vmatprep.subr.mxu0 0.0
      %119 = vmatpush1.msra.mxu0 0.0
      %120 = vmatprep.subr.mxu0 0.0
      %121 = vmatpush1.msra.mxu0 0.0
      %122 = vmatprep.subr.mxu0 0.0
      %123 = vmatpush1.msra.mxu0 0.0
      %124 = vmatprep.subr.mxu0 0.0
      %125 = vmatpush1.msra.mxu0 0.0
      %126 = vmatprep.subr.mxu0 0.0
      %127 = vmatpush1.msra.mxu0 0.0
      %128 = vmatprep.subr.mxu0 0.0
      %129 = vmatpush1.msra.mxu0 0.0
      %130 = vmatprep.subr.mxu0 0.0
      %131 = vmatpush1.msra.mxu0 0.0
      %132 = vmatprep.subr.mxu0 0.0
      %133 = vmatpush1.msra.mxu0 0.0
      %134 = vmatprep.subr.mxu0 0.0
      %135 = vmatpush1.msra.mxu0 0.0
      %136 = vmatprep.subr.mxu0 0.0
      %137 = vmatpush1.msra.mxu0 0.0
      %138 = vmatprep.subr.mxu0 0.0
      %139 = vmatpush1.msra.mxu0 0.0
      %140 = vmatprep.subr.mxu0 0.0
      %141 = vmatpush1.msra.mxu0 0.0
      %142 = vmatprep.mubr.f32.mxu0 0.0
      %143 = vmatmul.mubr.f32.gmra.mrb[0].mxu0 %v76
      %v144 = vpop.f32.mrb[0].mxu0
      %v145 = vadd.f32 %v72, %v144
      %v146 = vpop.f32.mrb[0].mxu0
      %147 = vdwg.mxu0
      %v148 = vtanh.pop %v145
      %vm149 = vcmask 523264
      %150 = vst.msk [vmem:[#allocation2] sm:$0xff] %vm149, %v148
    $region37: #{tpu_custom_call.1} parent=1 // pred_fallthru
      _
    %v151 = vld [vmem:[#allocation2] sm:$0xff]
    %v152 = vld [vmem:[#allocation8] sm:$0xff]
    %v153 = vld [vmem:[#allocation8 + $0x8] sm:$0xff]
    %v154 = vld [vmem:[#allocation8 + $0x10] sm:$0xff]
    %v155 = vld [vmem:[#allocation8 + $0x18] sm:$0xff]
    %v156 = vld [vmem:[#allocation8 + $0x20] sm:$0xff]
    %v157 = vld [vmem:[#allocation8 + $0x28] sm:$0xff]
    %v158 = vld [vmem:[#allocation8 + $0x30] sm:$0xff]
    %v159 = vld [vmem:[#allocation8 + $0x38] sm:$0xff]
    %v160 = vld [vmem:[%s4] sm:$0x1]
    %v162 = vlaneseq
    %v163 = vshrl.u32 %v162, 7
    %v164 = vsub.s32 0, %v163
    %v165 = vrot.slane %v160, %v164
    %vm167 = vcmask 523264
    %v169 = vsel %vm167, %v151, 0
    %171 = vmatprep.subr.mxu0 0.0
    %172 = vmatpush1.msra.mxu0 %v152
    %173 = vmatprep.subr.mxu0 0.0
    %174 = vmatpush1.msra.mxu0 %v153
    %175 = vmatprep.subr.mxu0 0.0
    %176 = vmatpush1.msra.mxu0 %v154
    %177 = vmatprep.subr.mxu0 0.0
    %178 = vmatpush1.msra.mxu0 %v155
    %179 = vmatprep.subr.mxu0 0.0
    %180 = vmatpush1.msra.mxu0 %v156
    %181 = vmatprep.subr.mxu0 0.0
    %182 = vmatpush1.msra.mxu0 %v157
    %183 = vmatprep.subr.mxu0 0.0
    %184 = vmatpush1.msra.mxu0 %v158
    %185 = vmatprep.subr.mxu0 0.0
    %186 = vmatpush1.msra.mxu0 %v159
    %187 = vmatprep.subr.mxu0 0.0
    %188 = vmatpush1.msra.mxu0 0.0
    %189 = vmatprep.subr.mxu0 0.0
    %190 = vmatpush1.msra.mxu0 0.0
    %191 = vmatprep.subr.mxu0 0.0
    %192 = vmatpush1.msra.mxu0 0.0
    %193 = vmatprep.subr.mxu0 0.0
    %194 = vmatpush1.msra.mxu0 0.0
    %195 = vmatprep.subr.mxu0 0.0
    %196 = vmatpush1.msra.mxu0 0.0
    %197 = vmatprep.subr.mxu0 0.0
    %198 = vmatpush1.msra.mxu0 0.0
    %199 = vmatprep.subr.mxu0 0.0
    %200 = vmatpush1.msra.mxu0 0.0
    %201 = vmatprep.subr.mxu0 0.0
    %202 = vmatpush1.msra.mxu0 0.0
    %203 = vmatprep.subr.mxu0 0.0
    %204 = vmatpush1.msra.mxu0 0.0
    %205 = vmatprep.subr.mxu0 0.0
    %206 = vmatpush1.msra.mxu0 0.0
    %207 = vmatprep.subr.mxu0 0.0
    %208 = vmatpush1.msra.mxu0 0.0
    %209 = vmatprep.subr.mxu0 0.0
    %210 = vmatpush1.msra.mxu0 0.0
    %211 = vmatprep.subr.mxu0 0.0
    %212 = vmatpush1.msra.mxu0 0.0
    %213 = vmatprep.subr.mxu0 0.0
    %214 = vmatpush1.msra.mxu0 0.0
    %215 = vmatprep.subr.mxu0 0.0
    %216 = vmatpush1.msra.mxu0 0.0
    %217 = vmatprep.subr.mxu0 0.0
    %218 = vmatpush1.msra.mxu0 0.0
    %219 = vmatprep.subr.mxu0 0.0
    %220 = vmatpush1.msra.mxu0 0.0
    %221 = vmatprep.subr.mxu0 0.0
    %222 = vmatpush1.msra.mxu0 0.0
    %223 = vmatprep.subr.mxu0 0.0
    %224 = vmatpush1.msra.mxu0 0.0
    %225 = vmatprep.subr.mxu0 0.0
    %226 = vmatpush1.msra.mxu0 0.0
    %227 = vmatprep.subr.mxu0 0.0
    %228 = vmatpush1.msra.mxu0 0.0
    %229 = vmatprep.subr.mxu0 0.0
    %230 = vmatpush1.msra.mxu0 0.0
    %231 = vmatprep.subr.mxu0 0.0
    %232 = vmatpush1.msra.mxu0 0.0
    %233 = vmatprep.subr.mxu0 0.0
    %234 = vmatpush1.msra.mxu0 0.0
    %235 = vmatprep.mubr.f32.mxu0 0.0
    %236 = vmatmul.mubr.f32.gmra.mrb[0].mxu0 %v169
    %v237 = vpop.f32.mrb[0].mxu0
    %v238 = vadd.f32 %v165, %v237
    %v239 = vpop.f32.mrb[0].mxu0
    %240 = vdwg.mxu0
    %241 = vst [vmem:[#allocation9] sm:$0xff] %v238
    // Predicated region
    $region38: #{tpu_custom_call.1} parent=1 // pred_check
      _
    $region39: #{tpu_custom_call.1} parent=1 // pred_check_branch
      %243 = sbr.rel (0) target = $region41
    $region40: #{tpu_custom_call.1} parent=1 // pred_region
      %s245 = ssub.s32 128, 128
      %246 = vsyncadd [#allocation5], %s245
      %s248 = sshll.u32 [#allocation9], 4
      %s249 = int_to_ptr.vmem [resolvable:$true] %s248
      %251 = dma.vmem_to_hbm [thread:$0]  %s249, 128, %s5, [#allocation5]
    $region41: #{tpu_custom_call.1} parent=1 // pred_fallthru
      _
    // Predicated region
    $region42: #{tpu_custom_call.1} parent=1 // pred_check
      _
    $region43: #{tpu_custom_call.1} parent=1 // pred_check_branch
      %253 = sbr.rel (0) target = $region45
    $region44: #{tpu_custom_call.1} parent=1 // pred_region
      %254 = dma.done [#allocation5], 128
    $region45: #{tpu_custom_call.1} parent=1 // pred_fallthru
      _
    %255 = vsyncpa [#allocation4], 1
    %256 = vsyncpa [#allocation7], 1
    %257 = vsyncpa [#allocation5], 1

</llo_original>
